<compile_context>
chip_gen: v6e
topology: v6e:2x2x1
jax: 0.10.0
libtpu: 0.0.40
codegen_flags: <defaults>
</compile_context>

<pallas_src>
import functools

import jax
import jax.numpy as jnp
from jax import lax
from jax.experimental import pallas as pl
from jax.experimental.pallas import tpu as pltpu


def _projection_head_kernel(x_ref, w1_ref, b1_ref, w2_ref, b2_ref,
                            gamma_ref, beta_ref, o_ref, *, approximate_gelu):
    # projected = x @ W1 + b1  -- native-dtype operands, f32 MXU accumulation.
    projected = jnp.dot(x_ref[...], w1_ref[...],
                        preferred_element_type=jnp.float32)
    projected = projected + b1_ref[...].astype(jnp.float32)

    if approximate_gelu:
        # tanh-GELU: transcendental goes to the EUP slot (cheap alongside MXU).
        h = jax.nn.gelu(projected, approximate=True)
    else:
        # exact GELU (PyTorch nn.GELU default): 0.5*x*(1+erf(x/sqrt(2)))
        inv_sqrt2 = jnp.float32(0.7071067811865476)
        h = 0.5 * projected * (1.0 + lax.erf(projected * inv_sqrt2))

    # fc = h @ W2 + b2 -- cast activation back to the weight dtype so the MXU
    # runs bf16 x bf16 when weights are bf16 (no-op for f32 weights).
    y = jnp.dot(h.astype(w2_ref.dtype), w2_ref[...],
                preferred_element_type=jnp.float32)
    y = y + b2_ref[...].astype(jnp.float32)

    # dropout (identity at inference) + residual
    z = y + projected

    # LayerNorm over last dim, eps = 1e-5 (PyTorch default)
    mean = jnp.mean(z, axis=-1, keepdims=True)
    zc = z - mean
    var = jnp.mean(zc * zc, axis=-1, keepdims=True)
    norm = zc * lax.rsqrt(var + jnp.float32(1e-5))

    o_ref[...] = (norm * gamma_ref[...].astype(jnp.float32)
                  + beta_ref[...].astype(jnp.float32)).astype(o_ref.dtype)


def _choose_block_b(B, E, P, x_dtype, w_dtype, vmem_budget_bytes):
    """Largest batch tile (multiple of 8) whose working set fits the budget."""
    x_bytes = jnp.dtype(x_dtype).itemsize
    w_bytes = jnp.dtype(w_dtype).itemsize
    # Weights have a constant index_map but are still double-buffered.
    weight_bytes = 2 * (E * P + P * P) * w_bytes + 2 * 4 * P * 4  # + 1D params
    budget = int(0.8 * vmem_budget_bytes) - weight_bytes
    budget = max(budget, 1 << 20)
    # Per batch row: double-buffered x tile + out tile, plus ~3 f32 temporaries.
    per_row = 2 * (E + P) * x_bytes + 3 * P * 4
    bb = budget // per_row
    bb = min(int(bb), 512)          # per-step overhead is amortized well before this
    if B >= 16:
        bb = min(bb, B // 2)        # keep >= 2 grid steps so v7x can use both TCs
    bb = max(8, (bb // 8) * 8)      # sublane granularity
    return bb


@functools.partial(
    jax.jit,
    static_argnames=("approximate_gelu", "block_b", "vmem_budget_bytes"))
def projection_head(x, w1, b1, w2, b2, gamma, beta, *,
                    approximate_gelu=False, block_b=None,
                    vmem_budget_bytes=32 * 1024 * 1024):
    """x: (B, E); w1: (E, P); b1: (P,); w2: (P, P); b2, gamma, beta: (P,).

    Weights are stored (in, out), i.e. the transpose of PyTorch's (out, in),
    so the forward pass is plain row-major x @ W + b on the MXU.
    """
    B, E = x.shape
    P = w1.shape[1]

    if block_b is None:
        block_b = _choose_block_b(B, E, P, x.dtype, w1.dtype, vmem_budget_bytes)

    # Pad ragged batches to a multiple of block_b (zero rows are numerically
    # benign: matmul->GELU->LayerNorm of a constant row stays finite).
    n_blocks = pl.cdiv(B, block_b)
    B_pad = n_blocks * block_b
    if B_pad != B:
        x = jnp.pad(x, ((0, B_pad - B), (0, 0)))

    # Present 1-D params as (1, P) lane-dense rows; broadcast implicitly in-kernel.
    b1_2d = b1.reshape(1, P)
    b2_2d = b2.reshape(1, P)
    gamma_2d = gamma.reshape(1, P)
    beta_2d = beta.reshape(1, P)

    kernel = functools.partial(_projection_head_kernel,
                               approximate_gelu=approximate_gelu)

    out = pl.pallas_call(
        kernel,
        out_shape=jax.ShapeDtypeStruct((B_pad, P), x.dtype),
        grid_spec=pltpu.PrefetchScalarGridSpec(
            num_scalar_prefetch=0,
            grid=(n_blocks,),
            in_specs=[
                pl.BlockSpec((block_b, E), lambda i: (i, 0)),  # x tile
                pl.BlockSpec((E, P), lambda i: (0, 0)),        # W1 (resident)
                pl.BlockSpec((1, P), lambda i: (0, 0)),        # b1
                pl.BlockSpec((P, P), lambda i: (0, 0)),        # W2 (resident)
                pl.BlockSpec((1, P), lambda i: (0, 0)),        # b2
                pl.BlockSpec((1, P), lambda i: (0, 0)),        # gamma
                pl.BlockSpec((1, P), lambda i: (0, 0)),        # beta
            ],
            out_specs=pl.BlockSpec((block_b, P), lambda i: (i, 0)),
        ),
        compiler_params=pltpu.CompilerParams(
            dimension_semantics=("parallel",),
            vmem_limit_bytes=vmem_budget_bytes),
    )(x, w1, b1_2d, w2, b2_2d, gamma_2d, beta_2d)

    return out[:B] if B_pad != B else out


def _reference(x, w1, b1, w2, b2, gamma, beta, *, approximate=False):
    projected = x @ w1 + b1
    h = jax.nn.gelu(projected, approximate=approximate)
    y = h @ w2 + b2
    z = y + projected
    mean = jnp.mean(z, axis=-1, keepdims=True)
    var = jnp.mean((z - mean) ** 2, axis=-1, keepdims=True)
    return (z - mean) / jnp.sqrt(var + 1e-5) * gamma + beta


if __name__ == "__main__":
    # Shapes consistent with the module: embedding_dim=64, projection_dim=128.
    B, E, P = 256, 64, 128

    key = jax.random.PRNGKey(0)
    kx, kw1, kb1, kw2, kb2 = jax.random.split(key, 5)

    x = jax.random.normal(kx, (B, E), dtype=jnp.float32)
    # Weights stored as (in, out) = W.T of PyTorch's (out, in) layout.
    w1 = jax.random.normal(kw1, (E, P), dtype=jnp.float32) * (1.0 / jnp.sqrt(E))
    b1 = jax.random.normal(kb1, (P,), dtype=jnp.float32) * 0.01
    w2 = jax.random.normal(kw2, (P, P), dtype=jnp.float32) * (1.0 / jnp.sqrt(P))
    b2 = jax.random.normal(kb2, (P,), dtype=jnp.float32) * 0.01
    gamma = jnp.ones((P,), dtype=jnp.float32)
    beta = jnp.zeros((P,), dtype=jnp.float32)

    # 1) f32, exact GELU (matches PyTorch nn.GELU() semantics).
    out = jax.block_until_ready(projection_head(x, w1, b1, w2, b2, gamma, beta))
    ref = _reference(x, w1, b1, w2, b2, gamma, beta, approximate=False)
    assert out.shape == (B, P)
    assert jnp.allclose(out, ref, atol=1e-4, rtol=1e-4)

    # 2) f32, tanh-approximate GELU (EUP fast path from the perf review).
    out_a = jax.block_until_ready(
        projection_head(x, w1, b1, w2, b2, gamma, beta, approximate_gelu=True))
    ref_a = _reference(x, w1, b1, w2, b2, gamma, beta, approximate=True)
    assert jnp.allclose(out_a, ref_a, atol=1e-4, rtol=1e-4)

    # 3) bf16 inputs/weights (native bf16 MXU path) + ragged batch (B=100).
    Br = 100
    to_bf16 = lambda a: a.astype(jnp.bfloat16)
    out_b = jax.block_until_ready(
        projection_head(to_bf16(x[:Br]), to_bf16(w1), to_bf16(b1), to_bf16(w2),
                        to_bf16(b2), to_bf16(gamma), to_bf16(beta)))
    assert out_b.shape == (Br, P)
    ref_b = _reference(x[:Br], w1, b1, w2, b2, gamma, beta, approximate=False)
    assert jnp.allclose(out_b.astype(jnp.float32), ref_b, atol=1e-1, rtol=1e-1)

    print("KERNEL_OK")
</pallas_src>

<mosaic_0001>
module attributes {stable_mosaic.version = 11 : i64} {
  func.func @_projection_head_kernel(%arg0: i32, %arg1: memref<128x64xf32, #tpu.memory_space<vmem>>, %arg2: memref<64x128xf32, #tpu.memory_space<vmem>>, %arg3: memref<1x128xf32, #tpu.memory_space<vmem>>, %arg4: memref<128x128xf32, #tpu.memory_space<vmem>>, %arg5: memref<1x128xf32, #tpu.memory_space<vmem>>, %arg6: memref<1x128xf32, #tpu.memory_space<vmem>>, %arg7: memref<1x128xf32, #tpu.memory_space<vmem>>, %arg8: memref<128x128xf32, #tpu.memory_space<vmem>>) attributes {dimension_semantics = [#tpu.dimension_semantics<parallel>], iteration_bounds = array<i64: 2>, scalar_prefetch = 0 : i64, scratch_operands = 0 : i64, tpu.core_type = #tpu.core_type<tc>, window_params = [{transform_indices = @transform_0, window_bounds = array<i64: 128, 64>}, {pipeline_mode = #tpu.pipeline_mode<synchronous>, transform_indices = @transform_1, window_bounds = array<i64: 64, 128>}, {pipeline_mode = #tpu.pipeline_mode<synchronous>, transform_indices = @transform_2, window_bounds = array<i64: 1, 128>}, {pipeline_mode = #tpu.pipeline_mode<synchronous>, transform_indices = @transform_3, window_bounds = array<i64: 128, 128>}, {pipeline_mode = #tpu.pipeline_mode<synchronous>, transform_indices = @transform_4, window_bounds = array<i64: 1, 128>}, {pipeline_mode = #tpu.pipeline_mode<synchronous>, transform_indices = @transform_5, window_bounds = array<i64: 1, 128>}, {pipeline_mode = #tpu.pipeline_mode<synchronous>, transform_indices = @transform_6, window_bounds = array<i64: 1, 128>}, {transform_indices = @transform_7, window_bounds = array<i64: 128, 128>}]} {
    %c0 = arith.constant 0 : index
    %c0_0 = arith.constant 0 : index
    %0 = vector.load %arg1[%c0, %c0_0] : memref<128x64xf32, #tpu.memory_space<vmem>>, vector<128x64xf32>
    %c0_1 = arith.constant 0 : index
    %c0_2 = arith.constant 0 : index
    %1 = vector.load %arg2[%c0_1, %c0_2] : memref<64x128xf32, #tpu.memory_space<vmem>>, vector<64x128xf32>
    %cst = arith.constant dense<0.000000e+00> : vector<128x128xf32>
    %2 = tpu.matmul %0, %1, %cst {dimension_numbers = #tpu.dot_dimension_numbers<[1], [0], [0], [1], [0, 0, 1, 1], [], []>} : vector<128x64xf32>, vector<64x128xf32>, vector<128x128xf32> -> vector<128x128xf32>
    %c0_3 = arith.constant 0 : index
    %c0_4 = arith.constant 0 : index
    %3 = vector.load %arg3[%c0_3, %c0_4] : memref<1x128xf32, #tpu.memory_space<vmem>>, vector<1x128xf32>
    %4 = vector.broadcast %3 : vector<1x128xf32> to vector<128x128xf32>
    %5 = arith.addf %2, %4 : vector<128x128xf32>
    %cst_5 = arith.constant 5.000000e-01 : f32
    %6 = vector.broadcast %cst_5 : f32 to vector<128x128xf32>
    %7 = arith.mulf %6, %5 : vector<128x128xf32>
    %cst_6 = arith.constant 0.707106769 : f32
    %8 = vector.broadcast %cst_6 : f32 to vector<128x128xf32>
    %9 = arith.mulf %5, %8 : vector<128x128xf32>
    %10 = math.erf %9 : vector<128x128xf32>
    %cst_7 = arith.constant 1.000000e+00 : f32
    %11 = vector.broadcast %cst_7 : f32 to vector<128x128xf32>
    %12 = arith.addf %11, %10 : vector<128x128xf32>
    %13 = arith.mulf %7, %12 : vector<128x128xf32>
    %c0_8 = arith.constant 0 : index
    %c0_9 = arith.constant 0 : index
    %14 = vector.load %arg4[%c0_8, %c0_9] : memref<128x128xf32, #tpu.memory_space<vmem>>, vector<128x128xf32>
    %cst_10 = arith.constant dense<0.000000e+00> : vector<128x128xf32>
    %15 = tpu.matmul %13, %14, %cst_10 {dimension_numbers = #tpu.dot_dimension_numbers<[1], [0], [0], [1], [0, 0, 1, 1], [], []>} : vector<128x128xf32>, vector<128x128xf32>, vector<128x128xf32> -> vector<128x128xf32>
    %c0_11 = arith.constant 0 : index
    %c0_12 = arith.constant 0 : index
    %16 = vector.load %arg5[%c0_11, %c0_12] : memref<1x128xf32, #tpu.memory_space<vmem>>, vector<1x128xf32>
    %17 = vector.broadcast %16 : vector<1x128xf32> to vector<128x128xf32>
    %18 = arith.addf %15, %17 : vector<128x128xf32>
    %19 = arith.addf %18, %5 : vector<128x128xf32>
    %cst_13 = arith.constant dense<0.000000e+00> : vector<128xf32>
    %20 = vector.multi_reduction <add>, %19, %cst_13 [1] : vector<128x128xf32> to vector<128xf32>
    %21 = vector.shape_cast %20 : vector<128xf32> to vector<128x1xf32>
    %cst_14 = arith.constant 1.280000e+02 : f32
    %22 = vector.broadcast %cst_14 : f32 to vector<128x1xf32>
    %23 = arith.divf %21, %22 : vector<128x1xf32>
    %24 = vector.broadcast %23 : vector<128x1xf32> to vector<128x128xf32>
    %25 = arith.subf %19, %24 : vector<128x128xf32>
    %26 = arith.mulf %25, %25 : vector<128x128xf32>
    %cst_15 = arith.constant dense<0.000000e+00> : vector<128xf32>
    %27 = vector.multi_reduction <add>, %26, %cst_15 [1] : vector<128x128xf32> to vector<128xf32>
    %28 = vector.shape_cast %27 : vector<128xf32> to vector<128x1xf32>
    %cst_16 = arith.constant 1.280000e+02 : f32
    %29 = vector.broadcast %cst_16 : f32 to vector<128x1xf32>
    %30 = arith.divf %28, %29 : vector<128x1xf32>
    %cst_17 = arith.constant 9.99999974E-6 : f32
    %31 = vector.broadcast %cst_17 : f32 to vector<128x1xf32>
    %32 = arith.addf %30, %31 : vector<128x1xf32>
    %33 = math.rsqrt %32 : vector<128x1xf32>
    %34 = vector.broadcast %33 : vector<128x1xf32> to vector<128x128xf32>
    %35 = arith.mulf %25, %34 : vector<128x128xf32>
    %c0_18 = arith.constant 0 : index
    %c0_19 = arith.constant 0 : index
    %36 = vector.load %arg6[%c0_18, %c0_19] : memref<1x128xf32, #tpu.memory_space<vmem>>, vector<1x128xf32>
    %37 = vector.broadcast %36 : vector<1x128xf32> to vector<128x128xf32>
    %38 = arith.mulf %35, %37 : vector<128x128xf32>
    %c0_20 = arith.constant 0 : index
    %c0_21 = arith.constant 0 : index
    %39 = vector.load %arg7[%c0_20, %c0_21] : memref<1x128xf32, #tpu.memory_space<vmem>>, vector<1x128xf32>
    %40 = vector.broadcast %39 : vector<1x128xf32> to vector<128x128xf32>
    %41 = arith.addf %38, %40 : vector<128x128xf32>
    %c0_22 = arith.constant 0 : index
    %c0_23 = arith.constant 0 : index
    %42 = vector.load %arg8[%c0_22, %c0_23] : memref<128x128xf32, #tpu.memory_space<vmem>>, vector<128x128xf32>
    tpu.vector_store %arg8[%c0_22, %c0_23], %41 {strides = array<i32>} : memref<128x128xf32, #tpu.memory_space<vmem>>, vector<128x128xf32>,
    return
  }
  func.func @transform_0(%arg0: i32) -> (i32, i32) {
    %c0_i32 = arith.constant 0 : i32
    %c0_i32_0 = arith.constant 0 : i32
    return %arg0, %c0_i32 : i32, i32
  }
  func.func @transform_1(%arg0: i32) -> (i32, i32) {
    %c0_i32 = arith.constant 0 : i32
    %c0_i32_0 = arith.constant 0 : i32
    %c0_i32_1 = arith.constant 0 : i32
    return %c0_i32, %c0_i32_0 : i32, i32
  }
  func.func @transform_2(%arg0: i32) -> (i32, i32) {
    %c0_i32 = arith.constant 0 : i32
    %c0_i32_0 = arith.constant 0 : i32
    %c0_i32_1 = arith.constant 0 : i32
    return %c0_i32, %c0_i32_0 : i32, i32
  }
  func.func @transform_3(%arg0: i32) -> (i32, i32) {
    %c0_i32 = arith.constant 0 : i32
    %c0_i32_0 = arith.constant 0 : i32
    %c0_i32_1 = arith.constant 0 : i32
    return %c0_i32, %c0_i32_0 : i32, i32
  }
  func.func @transform_4(%arg0: i32) -> (i32, i32) {
    %c0_i32 = arith.constant 0 : i32
    %c0_i32_0 = arith.constant 0 : i32
    %c0_i32_1 = arith.constant 0 : i32
    return %c0_i32, %c0_i32_0 : i32, i32
  }
  func.func @transform_5(%arg0: i32) -> (i32, i32) {
    %c0_i32 = arith.constant 0 : i32
    %c0_i32_0 = arith.constant 0 : i32
    %c0_i32_1 = arith.constant 0 : i32
    return %c0_i32, %c0_i32_0 : i32, i32
  }
  func.func @transform_6(%arg0: i32) -> (i32, i32) {
    %c0_i32 = arith.constant 0 : i32
    %c0_i32_0 = arith.constant 0 : i32
    %c0_i32_1 = arith.constant 0 : i32
    return %c0_i32, %c0_i32_0 : i32, i32
  }
  func.func @transform_7(%arg0: i32) -> (i32, i32) {
    %c0_i32 = arith.constant 0 : i32
    %c0_i32_0 = arith.constant 0 : i32
    return %arg0, %c0_i32 : i32, i32
  }
}

</mosaic_0001>

<llo_original>
// kernel: projection_head.1
$region0: #{projection_head.1}
  #allocation0 [shape = 'u32[]', space=smem, size = 0x4, offset = 0x4, fixed_abs, tag = 'smem constant byte address 0x4 - core index']
  #allocation1 [shape = 'u32[144,128]{1,0:T(1,128)}', space=vmem, size = 0x12000, scoped, tag = 'internal scratch']
  %s0 = inlined_call_operand.vmem [shape: f32[256,64], index: 0, kind: input, shape index: {}]
  %s1 = inlined_call_operand.vmem [shape: f32[64,128], index: 1, kind: input, shape index: {}]
  %s2 = inlined_call_operand.vmem [shape: f32[1,128], index: 2, kind: input, shape index: {}]
  %s3 = inlined_call_operand.vmem [shape: f32[128,128], index: 3, kind: input, shape index: {}]
  %s4 = inlined_call_operand.vmem [shape: f32[1,128], index: 4, kind: input, shape index: {}]
  %s5 = inlined_call_operand.vmem [shape: f32[1,128], index: 5, kind: input, shape index: {}]
  %s6 = inlined_call_operand.vmem [shape: f32[1,128], index: 6, kind: input, shape index: {}]
  %s7 = inlined_call_operand.hbm [shape: f32[256,128], index: 7, kind: output, shape index: {}]
  %s8 = sld [smem:[#allocation0]]
  $region61: #{projection_head.1} parent=0
    _
  %s10 = ssub.s32 1, %s8
  %s11 = scalar_select 0, %s10, %s8
  $region1: #{projection_head.1} parent=0
    #allocation2 [shape = 'u8[131072]{0}', space=vmem, size = 0x20000, scoped, tag = 'output window, operand 0']
    #allocation3 [shape = 's32[2]{0}', space=sflag, size = 0x8, scoped, tag = 'scoped memory for projection_head.1']
    %12 = vsyncpa [#allocation3], 0
    %s13 = scalar_lea.sflag [#allocation3], 1
    %14 = vsyncpa %s13, 0
    loop: start=0, step=1, limit=4
    $region2: #{projection_head.1} parent=1 // loop_pre_header
      _
    $region3: #{projection_head.1} parent=1 // loop_header
      %s16 = sphi 0, %s20
      %p17 = scmp.ge.s32.totalorder %s16, 4
      %s26 = sphi 0, %s28
      %s29 = sphi 0, %s26
      %s30 = sphi 0, %s29
      %s46 = sphi 0, %s30
      %s50 = sphi 0, %s50
      %s52 = sphi 0, %s50
      %s53 = sphi 0, %s52
      %s67 = sphi 0, %s53
      %s71 = sphi 0, %s71
      %s73 = sphi 0, %s71
      %s74 = sphi 0, %s73
      %s88 = sphi 0, %s74
      %s92 = sphi 0, %s92
      %s94 = sphi 0, %s92
      %s95 = sphi 0, %s94
      %s109 = sphi 0, %s95
      %s113 = sphi 0, %s113
      %s115 = sphi 0, %s113
      %s116 = sphi 0, %s115
      %s130 = sphi 0, %s116
      %s134 = sphi 0, %s134
      %s136 = sphi 0, %s134
      %s137 = sphi 0, %s136
      %s151 = sphi 0, %s137
      %s155 = sphi 0, %s155
      %s157 = sphi 0, %s155
      %s158 = sphi 0, %s157
      %s172 = sphi 0, %s158
      %s178 = sphi 0, %s180
      %s181 = sphi 0, %s178
      %s182 = sphi 0, %s181
      %s198 = sphi 0, %s182
    $region4: #{projection_head.1} parent=1 // loop_header_branch
      %19 = sbr.rel (%p17) target = $region8
    $region5: #{projection_head.1} parent=1 // loop_body
      %s21 = ssub.s32 %s16, 1
      %s22 = ssub.s32 %s16, 2
      %s23 = sadd.s32 %s16, 1
      %s24 = ssub.s32 %s16, %s23
      %p25 = scmp.eq.s32.totalorder %s24, 0
      %s27 = sadd.s32 %s26, 1
      %s28 = scalar_select %p25, %s26, %s27
      %p31 = pneg %p25
      %p32 = scmp.eq.s32.totalorder %s16, 1
      %p33 = por %p31, %p32
      %p34 = scmp.ne.s32.totalorder %s26, %s29
      %p35 = scmp.eq.s32.totalorder %s16, 0
      %p36 = por %p34, %p35
      %p37 = scmp.ne.s32.totalorder %s26, %s29
      %p38 = scmp.eq.s32.totalorder %s21, 1
      %p39 = por %p37, %p38
      %p40 = scmp.ne.s32.totalorder %s29, %s30
      %p41 = scmp.eq.s32.totalorder %s21, 0
      %p42 = por %p40, %p41
      %p43 = scmp.ne.s32.totalorder %s29, %s30
      %p44 = scmp.eq.s32.totalorder %s22, 1
      %p45 = por %p43, %p44
      %p47 = scmp.ne.s32.totalorder %s30, %s46
      %p48 = scmp.eq.s32.totalorder %s22, 0
      %p49 = por %p47, %p48
      %s51 = sadd.s32 %s50, 1
      %p54 = scmp.eq.s32.totalorder %s16, 1
      %p55 = scmp.ne.s32.totalorder %s50, %s52
      %p56 = scmp.eq.s32.totalorder %s16, 0
      %p57 = por %p55, %p56
      %p58 = scmp.ne.s32.totalorder %s50, %s52
      %p59 = scmp.eq.s32.totalorder %s21, 1
      %p60 = por %p58, %p59
      %p61 = scmp.ne.s32.totalorder %s52, %s53
      %p62 = scmp.eq.s32.totalorder %s21, 0
      %p63 = por %p61, %p62
      %p64 = scmp.ne.s32.totalorder %s52, %s53
      %p65 = scmp.eq.s32.totalorder %s22, 1
      %p66 = por %p64, %p65
      %p68 = scmp.ne.s32.totalorder %s53, %s67
      %p69 = scmp.eq.s32.totalorder %s22, 0
      %p70 = por %p68, %p69
      %s72 = sadd.s32 %s71, 1
      %p75 = scmp.eq.s32.totalorder %s16, 1
      %p76 = scmp.ne.s32.totalorder %s71, %s73
      %p77 = scmp.eq.s32.totalorder %s16, 0
      %p78 = por %p76, %p77
      %p79 = scmp.ne.s32.totalorder %s71, %s73
      %p80 = scmp.eq.s32.totalorder %s21, 1
      %p81 = por %p79, %p80
      %p82 = scmp.ne.s32.totalorder %s73, %s74
      %p83 = scmp.eq.s32.totalorder %s21, 0
      %p84 = por %p82, %p83
      %p85 = scmp.ne.s32.totalorder %s73, %s74
      %p86 = scmp.eq.s32.totalorder %s22, 1
      %p87 = por %p85, %p86
      %p89 = scmp.ne.s32.totalorder %s74, %s88
      %p90 = scmp.eq.s32.totalorder %s22, 0
      %p91 = por %p89, %p90
      %s93 = sadd.s32 %s92, 1
      %p96 = scmp.eq.s32.totalorder %s16, 1
      %p97 = scmp.ne.s32.totalorder %s92, %s94
      %p98 = scmp.eq.s32.totalorder %s16, 0
      %p99 = por %p97, %p98
      %p100 = scmp.ne.s32.totalorder %s92, %s94
      %p101 = scmp.eq.s32.totalorder %s21, 1
      %p102 = por %p100, %p101
      %p103 = scmp.ne.s32.totalorder %s94, %s95
      %p104 = scmp.eq.s32.totalorder %s21, 0
      %p105 = por %p103, %p104
      %p106 = scmp.ne.s32.totalorder %s94, %s95
      %p107 = scmp.eq.s32.totalorder %s22, 1
      %p108 = por %p106, %p107
      %p110 = scmp.ne.s32.totalorder %s95, %s109
      %p111 = scmp.eq.s32.totalorder %s22, 0
      %p112 = por %p110, %p111
      %s114 = sadd.s32 %s113, 1
      %p117 = scmp.eq.s32.totalorder %s16, 1
      %p118 = scmp.ne.s32.totalorder %s113, %s115
      %p119 = scmp.eq.s32.totalorder %s16, 0
      %p120 = por %p118, %p119
      %p121 = scmp.ne.s32.totalorder %s113, %s115
      %p122 = scmp.eq.s32.totalorder %s21, 1
      %p123 = por %p121, %p122
      %p124 = scmp.ne.s32.totalorder %s115, %s116
      %p125 = scmp.eq.s32.totalorder %s21, 0
      %p126 = por %p124, %p125
      %p127 = scmp.ne.s32.totalorder %s115, %s116
      %p128 = scmp.eq.s32.totalorder %s22, 1
      %p129 = por %p127, %p128
      %p131 = scmp.ne.s32.totalorder %s116, %s130
      %p132 = scmp.eq.s32.totalorder %s22, 0
      %p133 = por %p131, %p132
      %s135 = sadd.s32 %s134, 1
      %p138 = scmp.eq.s32.totalorder %s16, 1
      %p139 = scmp.ne.s32.totalorder %s134, %s136
      %p140 = scmp.eq.s32.totalorder %s16, 0
      %p141 = por %p139, %p140
      %p142 = scmp.ne.s32.totalorder %s134, %s136
      %p143 = scmp.eq.s32.totalorder %s21, 1
      %p144 = por %p142, %p143
      %p145 = scmp.ne.s32.totalorder %s136, %s137
      %p146 = scmp.eq.s32.totalorder %s21, 0
      %p147 = por %p145, %p146
      %p148 = scmp.ne.s32.totalorder %s136, %s137
      %p149 = scmp.eq.s32.totalorder %s22, 1
      %p150 = por %p148, %p149
      %p152 = scmp.ne.s32.totalorder %s137, %s151
      %p153 = scmp.eq.s32.totalorder %s22, 0
      %p154 = por %p152, %p153
      %s156 = sadd.s32 %s155, 1
      %p159 = scmp.eq.s32.totalorder %s16, 1
      %p160 = scmp.ne.s32.totalorder %s155, %s157
      %p161 = scmp.eq.s32.totalorder %s16, 0
      %p162 = por %p160, %p161
      %p163 = scmp.ne.s32.totalorder %s155, %s157
      %p164 = scmp.eq.s32.totalorder %s21, 1
      %p165 = por %p163, %p164
      %p166 = scmp.ne.s32.totalorder %s157, %s158
      %p167 = scmp.eq.s32.totalorder %s21, 0
      %p168 = por %p166, %p167
      %p169 = scmp.ne.s32.totalorder %s157, %s158
      %p170 = scmp.eq.s32.totalorder %s22, 1
      %p171 = por %p169, %p170
      %p173 = scmp.ne.s32.totalorder %s158, %s172
      %p174 = scmp.eq.s32.totalorder %s22, 0
      %p175 = por %p173, %p174
      %s176 = ssub.s32 %s16, %s23
      %p177 = scmp.eq.s32.totalorder %s176, 0
      %s179 = sadd.s32 %s178, 1
      %s180 = scalar_select %p177, %s178, %s179
      %p183 = pneg %p177
      %p184 = scmp.eq.s32.totalorder %s16, 1
      %p185 = por %p183, %p184
      %p186 = scmp.ne.s32.totalorder %s178, %s181
      %p187 = scmp.eq.s32.totalorder %s16, 0
      %p188 = por %p186, %p187
      %p189 = scmp.ne.s32.totalorder %s178, %s181
      %p190 = scmp.eq.s32.totalorder %s21, 1
      %p191 = por %p189, %p190
      %p192 = scmp.ne.s32.totalorder %s181, %s182
      %p193 = scmp.eq.s32.totalorder %s21, 0
      %p194 = por %p192, %p193
      %p195 = scmp.ne.s32.totalorder %s181, %s182
      %p196 = scmp.eq.s32.totalorder %s22, 1
      %p197 = por %p195, %p196
      %p199 = scmp.ne.s32.totalorder %s182, %s198
      %p200 = scmp.eq.s32.totalorder %s22, 0
      %p201 = por %p199, %p200
      %p202 = scmp.le.s32.totalorder 1, %s16
      %p203 = scmp.lt.s32.totalorder %s16, 3
      %p204 = pnand %p202, %p203
      %p205 = pneg %p204
      // Predicated region
      $region9: #{projection_head.1} parent=5 // pred_check
        _
      $region10: #{projection_head.1} parent=5 // pred_check_branch
        %207 = sbr.rel (%p204) target = $region12
      $region11: #{projection_head.1} parent=5 // pred_region
        %s208 = ssub.s32 %s16, 1
        // Predicated region
        $region13: #{projection_head.1} parent=11 // pred_check
          %p209 = pneg %p63
        $region14: #{projection_head.1} parent=11 // pred_check_branch
          %211 = sbr.rel (%p209) target = $region16
        $region15: #{projection_head.1} parent=11 // pred_region
          _
        $region16: #{projection_head.1} parent=11 // pred_fallthru
          _
        // Predicated region
        $region17: #{projection_head.1} parent=11 // pred_check
          %p212 = pneg %p84
        $region18: #{projection_head.1} parent=11 // pred_check_branch
          %214 = sbr.rel (%p212) target = $region20
        $region19: #{projection_head.1} parent=11 // pred_region
          _
        $region20: #{projection_head.1} parent=11 // pred_fallthru
          _
        // Predicated region
        $region21: #{projection_head.1} parent=11 // pred_check
          %p215 = pneg %p105
        $region22: #{projection_head.1} parent=11 // pred_check_branch
          %217 = sbr.rel (%p215) target = $region24
        $region23: #{projection_head.1} parent=11 // pred_region
          _
        $region24: #{projection_head.1} parent=11 // pred_fallthru
          _
        // Predicated region
        $region25: #{projection_head.1} parent=11 // pred_check
          %p218 = pneg %p126
        $region26: #{projection_head.1} parent=11 // pred_check_branch
          %220 = sbr.rel (%p218) target = $region28
        $region27: #{projection_head.1} parent=11 // pred_region
          _
        $region28: #{projection_head.1} parent=11 // pred_fallthru
          _
        // Predicated region
        $region29: #{projection_head.1} parent=11 // pred_check
          %p221 = pneg %p147
        $region30: #{projection_head.1} parent=11 // pred_check_branch
          %223 = sbr.rel (%p221) target = $region32
        $region31: #{projection_head.1} parent=11 // pred_region
          _
        $region32: #{projection_head.1} parent=11 // pred_fallthru
          _
        // Predicated region
        $region33: #{projection_head.1} parent=11 // pred_check
          %p224 = pneg %p168
        $region34: #{projection_head.1} parent=11 // pred_check_branch
          %226 = sbr.rel (%p224) target = $region36
        $region35: #{projection_head.1} parent=11 // pred_region
          _
        $region36: #{projection_head.1} parent=11 // pred_fallthru
          _
      $region12: #{projection_head.1} parent=5 // pred_fallthru
        _
      %p227 = scmp.lt.s32.totalorder %s16, 2
      // Predicated region
      $region37: #{projection_head.1} parent=5 // pred_check
        %p228 = pneg %p227
      $region38: #{projection_head.1} parent=5 // pred_check_branch
        %230 = sbr.rel (%p228) target = $region40
      $region39: #{projection_head.1} parent=5 // pred_region
        // Predicated region
        $region41: #{projection_head.1} parent=39 // pred_check
          %p231 = pneg %p36
        $region42: #{projection_head.1} parent=39 // pred_check_branch
          %233 = sbr.rel (%p231) target = $region44
        $region43: #{projection_head.1} parent=39 // pred_region
          %s234 = smul.u32 16, %s16
          %p235 = scmp.lt.s32.totalorder %s234, 31
          %s236 = scalar_select %p235, %s234, 31
          %s237 = smul.addr %s236, 8
          %s238 = scalar_lea.vmem %s0, %s237
          %s239 = smul.u32 16, %s16
        $region44: #{projection_head.1} parent=39 // pred_fallthru
          _
      $region40: #{projection_head.1} parent=5 // pred_fallthru
        _
      %p240 = scmp.le.s32.totalorder 1, %s16
      %p241 = scmp.lt.s32.totalorder %s16, 3
      %p242 = pnand %p240, %p241
      %p243 = pneg %p242
      // Predicated region
      $region45: #{projection_head.1} parent=5 // pred_check
        _
      $region46: #{projection_head.1} parent=5 // pred_check_branch
        %245 = sbr.rel (%p242) target = $region48
      $region47: #{projection_head.1} parent=5 // pred_region
        %s246 = ssub.s32 %s16, 1
        %s247 = smul.u32 16, %s21
        %p248 = scmp.lt.s32.totalorder %s247, 31
        %s249 = scalar_select %p248, %s247, 31
        %s250 = smul.addr %s249, 8
        %s251 = scalar_lea.vmem %s0, %s250
        %p252 = pneg %p42
        %p253 = pneg %p39
        %p254 = pneg %p63
        %p255 = pneg %p60
        %p256 = pneg %p84
        %p257 = pneg %p81
        %p258 = pneg %p105
        %p259 = pneg %p102
        %p260 = pneg %p126
        %p261 = pneg %p123
        %p262 = pneg %p147
        %p263 = pneg %p144
        %p264 = pneg %p168
        %p265 = pneg %p165
        %p266 = pneg %p194
        %p267 = pneg %p191
        %s268 = sand.u32 %s181, 1
        %s269 = scalar_lea.sflag [#allocation3], %s268
        %s270 = sand.u32 %s181, 1
        %s271 = smul.addr %s270, 128
        %s272 = scalar_lea.vmem [#allocation2], %s271
        %s273 = smul.u32 16, %s21
        %p274 = scmp.lt.s32.totalorder %s273, 31
        %s275 = scalar_select %p274, %s273, 31
        %s276 = smul.addr %s275, 8
        %s277 = scalar_lea.vmem %s0, %s276
        %s278 = smul.u32 16, %s21
        %s279 = smul.u32 16, %s21
        %v280 = vld [vmem:[%s277] sm:$0xff]
        %v281 = vld [vmem:[%s277 + $0x8] sm:$0xff]
        %v282 = vld [vmem:[%s277 + $0x10] sm:$0xff]
        %v283 = vld [vmem:[%s277 + $0x18] sm:$0xff]
        %v284 = vld [vmem:[%s277 + $0x20] sm:$0xff]
        %v285 = vld [vmem:[%s277 + $0x28] sm:$0xff]
        %v286 = vld [vmem:[%s277 + $0x30] sm:$0xff]
        %v287 = vld [vmem:[%s277 + $0x38] sm:$0xff]
        %v288 = vld [vmem:[%s277 + $0x40] sm:$0xff]
        %v289 = vld [vmem:[%s277 + $0x48] sm:$0xff]
        %v290 = vld [vmem:[%s277 + $0x50] sm:$0xff]
        %v291 = vld [vmem:[%s277 + $0x58] sm:$0xff]
        %v292 = vld [vmem:[%s277 + $0x60] sm:$0xff]
        %v293 = vld [vmem:[%s277 + $0x68] sm:$0xff]
        %v294 = vld [vmem:[%s277 + $0x70] sm:$0xff]
        %v295 = vld [vmem:[%s277 + $0x78] sm:$0xff]
        %v296 = vld [vmem:[%s1] sm:$0xff]
        %v297 = vld [vmem:[%s1 + $0x8] sm:$0xff]
        %v298 = vld [vmem:[%s1 + $0x10] sm:$0xff]
        %v299 = vld [vmem:[%s1 + $0x18] sm:$0xff]
        %v300 = vld [vmem:[%s1 + $0x20] sm:$0xff]
        %v301 = vld [vmem:[%s1 + $0x28] sm:$0xff]
        %v302 = vld [vmem:[%s1 + $0x30] sm:$0xff]
        %v303 = vld [vmem:[%s1 + $0x38] sm:$0xff]
        %v304 = vld [vmem:[%s2] sm:$0x1]
        %v306 = vlaneseq
        %v307 = vshrl.u32 %v306, 7
        %v308 = vsub.s32 0, %v307
        %v309 = vrot.slane %v304, %v308
        %vm311 = vcmask 523264
        %v313 = vsel %vm311, %v280, 0
        %v316 = vsel %vm311, %v281, 0
        %v319 = vsel %vm311, %v282, 0
        %v322 = vsel %vm311, %v283, 0
        %v325 = vsel %vm311, %v284, 0
        %v328 = vsel %vm311, %v285, 0
        %v331 = vsel %vm311, %v286, 0
        %v334 = vsel %vm311, %v287, 0
        %v337 = vsel %vm311, %v288, 0
        %v340 = vsel %vm311, %v289, 0
        %v343 = vsel %vm311, %v290, 0
        %v346 = vsel %vm311, %v291, 0
        %v349 = vsel %vm311, %v292, 0
        %v352 = vsel %vm311, %v293, 0
        %v355 = vsel %vm311, %v294, 0
        %v358 = vsel %vm311, %v295, 0
        %360 = vmatprep.subr.mxu0 0.0
        %361 = vmatpush1.msra.mxu0 0.0
        %362 = vmatprep.subr.mxu0 0.0
        %363 = vmatpush1.msra.mxu0 0.0
        %364 = vmatprep.subr.mxu0 0.0
        %365 = vmatpush1.msra.mxu0 0.0
        %366 = vmatprep.subr.mxu0 0.0
        %367 = vmatpush1.msra.mxu0 0.0
        %368 = vmatprep.subr.mxu0 0.0
        %369 = vmatpush1.msra.mxu0 0.0
        %370 = vmatprep.subr.mxu0 0.0
        %371 = vmatpush1.msra.mxu0 0.0
        %372 = vmatprep.subr.mxu0 0.0
        %373 = vmatpush1.msra.mxu0 0.0
        %374 = vmatprep.subr.mxu0 0.0
        %375 = vmatpush1.msra.mxu0 0.0
        %376 = vmatprep.subr.mxu0 0.0
        %377 = vmatpush1.msra.mxu0 %v303
        %378 = vmatprep.subr.mxu0 0.0
        %379 = vmatpush1.msra.mxu0 %v302
        %380 = vmatprep.subr.mxu0 0.0
        %381 = vmatpush1.msra.mxu0 %v301
        %382 = vmatprep.subr.mxu0 0.0
        %383 = vmatpush1.msra.mxu0 %v300
        %384 = vmatprep.subr.mxu0 0.0
        %385 = vmatpush1.msra.mxu0 %v299
        %386 = vmatprep.subr.mxu0 0.0
        %387 = vmatpush1.msra.mxu0 %v298
        %388 = vmatprep.subr.mxu0 0.0
        %389 = vmatpush1.msra.mxu0 %v297
        %390 = vmatprep.subr.mxu0 0.0
        %391 = vmatpush1.msra.mxu0 %v296
        %392 = vmatprep.subr.mxu0 0.0
        %393 = vmatpush2.msra.mxu0 0.0
        %394 = vmatprep.subr.mxu0 0.0
        %395 = vmatpush2.msra.mxu0 0.0
        %396 = vmatprep.subr.mxu0 0.0
        %397 = vmatpush2.msra.mxu0 0.0
        %398 = vmatprep.subr.mxu0 0.0
        %399 = vmatpush2.msra.mxu0 0.0
        %400 = vmatprep.subr.mxu0 0.0
        %401 = vmatpush2.msra.mxu0 0.0
        %402 = vmatprep.subr.mxu0 0.0
        %403 = vmatpush2.msra.mxu0 0.0
        %404 = vmatprep.subr.mxu0 0.0
        %405 = vmatpush2.msra.mxu0 0.0
        %406 = vmatprep.subr.mxu0 0.0
        %407 = vmatpush2.msra.mxu0 0.0
        %408 = vmatprep.subr.mxu0 0.0
        %409 = vmatpush2.msra.mxu0 0.0
        %410 = vmatprep.subr.mxu0 0.0
        %411 = vmatpush2.msra.mxu0 0.0
        %412 = vmatprep.subr.mxu0 0.0
        %413 = vmatpush2.msra.mxu0 0.0
        %414 = vmatprep.subr.mxu0 0.0
        %415 = vmatpush2.msra.mxu0 0.0
        %416 = vmatprep.subr.mxu0 0.0
        %417 = vmatpush2.msra.mxu0 0.0
        %418 = vmatprep.subr.mxu0 0.0
        %419 = vmatpush2.msra.mxu0 0.0
        %420 = vmatprep.subr.mxu0 0.0
        %421 = vmatpush2.msra.mxu0 0.0
        %422 = vmatprep.subr.mxu0 0.0
        %423 = vmatpush2.msra.mxu0 0.0
        %424 = vmatprep.mubr.f32.mxu0 0.0
        %425 = vmatmul.mubr.f32.gmra.mxu0 %v313
        %v426 = vpop.f32.mrf.mxu0
        %v427 = vadd.f32 %v309, %v426
        %v428 = vpop.f32.mrf.mxu0
        %429 = vmatprep.mubr.f32.mxu0 0.0
        %430 = vmatmul.mubr.f32.gmra.mxu0 %v316
        %v431 = vpop.f32.mrf.mxu0
        %v432 = vadd.f32 %v309, %v431
        %v433 = vpop.f32.mrf.mxu0
        %434 = vmatprep.mubr.f32.mxu0 0.0
        %435 = vmatmul.mubr.f32.gmra.mxu0 %v319
        %v436 = vpop.f32.mrf.mxu0
        %v437 = vadd.f32 %v309, %v436
        %v438 = vpop.f32.mrf.mxu0
        %439 = vmatprep.mubr.f32.mxu0 0.0
        %440 = vmatmul.mubr.f32.gmra.mxu0 %v322
        %v441 = vpop.f32.mrf.mxu0
        %v442 = vadd.f32 %v309, %v441
        %v443 = vpop.f32.mrf.mxu0
        %444 = vmatprep.mubr.f32.mxu0 0.0
        %445 = vmatmul.mubr.f32.gmra.mxu0 %v325
        %v446 = vpop.f32.mrf.mxu0
        %v447 = vadd.f32 %v309, %v446
        %v448 = vpop.f32.mrf.mxu0
        %449 = vmatprep.mubr.f32.mxu0 0.0
        %450 = vmatmul.mubr.f32.gmra.mxu0 %v328
        %v451 = vpop.f32.mrf.mxu0
        %v452 = vadd.f32 %v309, %v451
        %v453 = vpop.f32.mrf.mxu0
        %454 = vmatprep.mubr.f32.mxu0 0.0
        %455 = vmatmul.mubr.f32.gmra.mxu0 %v331
        %v456 = vpop.f32.mrf.mxu0
        %v457 = vadd.f32 %v309, %v456
        %v458 = vpop.f32.mrf.mxu0
        %459 = vmatprep.mubr.f32.mxu0 0.0
        %460 = vmatmul.mubr.f32.gmra.mxu0 %v334
        %v461 = vpop.f32.mrf.mxu0
        %v462 = vadd.f32 %v309, %v461
        %v463 = vpop.f32.mrf.mxu0
        %464 = vmatprep.mubr.f32.mxu0 0.0
        %465 = vmatmul.mubr.f32.gmra.mxu0 %v337
        %v466 = vpop.f32.mrf.mxu0
        %v467 = vadd.f32 %v309, %v466
        %v468 = vpop.f32.mrf.mxu0
        %469 = vmatprep.mubr.f32.mxu0 0.0
        %470 = vmatmul.mubr.f32.gmra.mxu0 %v340
        %v471 = vpop.f32.mrf.mxu0
        %v472 = vadd.f32 %v309, %v471
        %v473 = vpop.f32.mrf.mxu0
        %474 = vmatprep.mubr.f32.mxu0 0.0
        %475 = vmatmul.mubr.f32.gmra.mxu0 %v343
        %v476 = vpop.f32.mrf.mxu0
        %v477 = vadd.f32 %v309, %v476
        %v478 = vpop.f32.mrf.mxu0
        %479 = vmatprep.mubr.f32.mxu0 0.0
        %480 = vmatmul.mubr.f32.gmra.mxu0 %v346
        %v481 = vpop.f32.mrf.mxu0
        %v482 = vadd.f32 %v309, %v481
        %v483 = vpop.f32.mrf.mxu0
        %484 = vmatprep.mubr.f32.mxu0 0.0
        %485 = vmatmul.mubr.f32.gmra.mxu0 %v349
        %v486 = vpop.f32.mrf.mxu0
        %v487 = vadd.f32 %v309, %v486
        %v488 = vpop.f32.mrf.mxu0
        %489 = vmatprep.mubr.f32.mxu0 0.0
        %490 = vmatmul.mubr.f32.gmra.mxu0 %v352
        %v491 = vpop.f32.mrf.mxu0
        %v492 = vadd.f32 %v309, %v491
        %v493 = vpop.f32.mrf.mxu0
        %494 = vmatprep.mubr.f32.mxu0 0.0
        %495 = vmatmul.mubr.f32.gmra.mxu0 %v355
        %v496 = vpop.f32.mrf.mxu0
        %v497 = vadd.f32 %v309, %v496
        %v498 = vpop.f32.mrf.mxu0
        %499 = vmatprep.mubr.f32.mxu0 0.0
        %500 = vmatmul.mubr.f32.gmra.mxu0 %v358
        %v501 = vpop.f32.mrf.mxu0
        %v502 = vadd.f32 %v309, %v501
        %v503 = vpop.f32.mrf.mxu0
        %504 = vdwg.mxu0
        %v505 = vmul.f32 %v427, 0.5
        %v506 = vmul.f32 %v432, 0.5
        %v507 = vmul.f32 %v437, 0.5
        %v508 = vmul.f32 %v442, 0.5
        %v509 = vmul.f32 %v447, 0.5
        %v510 = vmul.f32 %v452, 0.5
        %v511 = vmul.f32 %v457, 0.5
        %v512 = vmul.f32 %v462, 0.5
        %v513 = vmul.f32 %v467, 0.5
        %v514 = vmul.f32 %v472, 0.5
        %v515 = vmul.f32 %v477, 0.5
        %v516 = vmul.f32 %v482, 0.5
        %v517 = vmul.f32 %v487, 0.5
        %v518 = vmul.f32 %v492, 0.5
        %v519 = vmul.f32 %v497, 0.5
        %v520 = vmul.f32 %v502, 0.5
        %v521 = vmul.f32 %v427, 0.70710677
        %v522 = vmul.f32 %v432, 0.70710677
        %v523 = vmul.f32 %v437, 0.70710677
        %v524 = vmul.f32 %v442, 0.70710677
        %v525 = vmul.f32 %v447, 0.70710677
        %v526 = vmul.f32 %v452, 0.70710677
        %v527 = vmul.f32 %v457, 0.70710677
        %v528 = vmul.f32 %v462, 0.70710677
        %v529 = vmul.f32 %v467, 0.70710677
        %v530 = vmul.f32 %v472, 0.70710677
        %v531 = vmul.f32 %v477, 0.70710677
        %v532 = vmul.f32 %v482, 0.70710677
        %v533 = vmul.f32 %v487, 0.70710677
        %v534 = vmul.f32 %v492, 0.70710677
        %v535 = vmul.f32 %v497, 0.70710677
        %v536 = vmul.f32 %v502, 0.70710677
        %v537 = verf.f32.pop %v521
        %v538 = verf.f32.pop %v522
        %v539 = verf.f32.pop %v523
        %v540 = verf.f32.pop %v524
        %v541 = verf.f32.pop %v525
        %v542 = verf.f32.pop %v526
        %v543 = verf.f32.pop %v527
        %v544 = verf.f32.pop %v528
        %v545 = verf.f32.pop %v529
        %v546 = verf.f32.pop %v530
        %v547 = verf.f32.pop %v531
        %v548 = verf.f32.pop %v532
        %v549 = verf.f32.pop %v533
        %v550 = verf.f32.pop %v534
        %v551 = verf.f32.pop %v535
        %v552 = verf.f32.pop %v536
        %v553 = vadd.f32 %v537, 1.0
        %v554 = vadd.f32 %v538, 1.0
        %v555 = vadd.f32 %v539, 1.0
        %v556 = vadd.f32 %v540, 1.0
        %v557 = vadd.f32 %v541, 1.0
        %v558 = vadd.f32 %v542, 1.0
        %v559 = vadd.f32 %v543, 1.0
        %v560 = vadd.f32 %v544, 1.0
        %v561 = vadd.f32 %v545, 1.0
        %v562 = vadd.f32 %v546, 1.0
        %v563 = vadd.f32 %v547, 1.0
        %v564 = vadd.f32 %v548, 1.0
        %v565 = vadd.f32 %v549, 1.0
        %v566 = vadd.f32 %v550, 1.0
        %v567 = vadd.f32 %v551, 1.0
        %v568 = vadd.f32 %v552, 1.0
        %v569 = vmul.f32 %v505, %v553
        %v570 = vmul.f32 %v506, %v554
        %v571 = vmul.f32 %v507, %v555
        %v572 = vmul.f32 %v508, %v556
        %v573 = vmul.f32 %v509, %v557
        %v574 = vmul.f32 %v510, %v558
        %v575 = vmul.f32 %v511, %v559
        %v576 = vmul.f32 %v512, %v560
        %v577 = vmul.f32 %v513, %v561
        %v578 = vmul.f32 %v514, %v562
        %v579 = vmul.f32 %v515, %v563
        %v580 = vmul.f32 %v516, %v564
        %v581 = vmul.f32 %v517, %v565
        %v582 = vmul.f32 %v518, %v566
        %v583 = vmul.f32 %v519, %v567
        %v584 = vmul.f32 %v520, %v568
        %v585 = vld [vmem:[%s3] sm:$0xff]
        %v586 = vld [vmem:[%s3 + $0x8] sm:$0xff]
        %v587 = vld [vmem:[%s3 + $0x10] sm:$0xff]
        %v588 = vld [vmem:[%s3 + $0x18] sm:$0xff]
        %v589 = vld [vmem:[%s3 + $0x20] sm:$0xff]
        %v590 = vld [vmem:[%s3 + $0x28] sm:$0xff]
        %v591 = vld [vmem:[%s3 + $0x30] sm:$0xff]
        %v592 = vld [vmem:[%s3 + $0x38] sm:$0xff]
        %v593 = vld [vmem:[%s3 + $0x40] sm:$0xff]
        %v594 = vld [vmem:[%s3 + $0x48] sm:$0xff]
        %v595 = vld [vmem:[%s3 + $0x50] sm:$0xff]
        %v596 = vld [vmem:[%s3 + $0x58] sm:$0xff]
        %v597 = vld [vmem:[%s3 + $0x60] sm:$0xff]
        %v598 = vld [vmem:[%s3 + $0x68] sm:$0xff]
        %v599 = vld [vmem:[%s3 + $0x70] sm:$0xff]
        %v600 = vld [vmem:[%s3 + $0x78] sm:$0xff]
        %v601 = vld [vmem:[%s4] sm:$0x1]
        %v603 = vlaneseq
        %v604 = vshrl.u32 %v603, 7
        %v605 = vsub.s32 0, %v604
        %v606 = vrot.slane %v601, %v605
        %608 = vmatprep.subr.mxu0 0.0
        %609 = vmatpush1.msra.mxu0 %v600
        %610 = vmatprep.subr.mxu0 0.0
        %611 = vmatpush1.msra.mxu0 %v599
        %612 = vmatprep.subr.mxu0 0.0
        %613 = vmatpush1.msra.mxu0 %v598
        %614 = vmatprep.subr.mxu0 0.0
        %615 = vmatpush1.msra.mxu0 %v597
        %616 = vmatprep.subr.mxu0 0.0
        %617 = vmatpush1.msra.mxu0 %v596
        %618 = vmatprep.subr.mxu0 0.0
        %619 = vmatpush1.msra.mxu0 %v595
        %620 = vmatprep.subr.mxu0 0.0
        %621 = vmatpush1.msra.mxu0 %v594
        %622 = vmatprep.subr.mxu0 0.0
        %623 = vmatpush1.msra.mxu0 %v593
        %624 = vmatprep.subr.mxu0 0.0
        %625 = vmatpush1.msra.mxu0 %v592
        %626 = vmatprep.subr.mxu0 0.0
        %627 = vmatpush1.msra.mxu0 %v591
        %628 = vmatprep.subr.mxu0 0.0
        %629 = vmatpush1.msra.mxu0 %v590
        %630 = vmatprep.subr.mxu0 0.0
        %631 = vmatpush1.msra.mxu0 %v589
        %632 = vmatprep.subr.mxu0 0.0
        %633 = vmatpush1.msra.mxu0 %v588
        %634 = vmatprep.subr.mxu0 0.0
        %635 = vmatpush1.msra.mxu0 %v587
        %636 = vmatprep.subr.mxu0 0.0
        %637 = vmatpush1.msra.mxu0 %v586
        %638 = vmatprep.subr.mxu0 0.0
        %639 = vmatpush1.msra.mxu0 %v585
        %640 = vmatprep.subr.mxu0 0.0
        %641 = vmatpush2.msra.mxu0 0.0
        %642 = vmatprep.subr.mxu0 0.0
        %643 = vmatpush2.msra.mxu0 0.0
        %644 = vmatprep.subr.mxu0 0.0
        %645 = vmatpush2.msra.mxu0 0.0
        %646 = vmatprep.subr.mxu0 0.0
        %647 = vmatpush2.msra.mxu0 0.0
        %648 = vmatprep.subr.mxu0 0.0
        %649 = vmatpush2.msra.mxu0 0.0
        %650 = vmatprep.subr.mxu0 0.0
        %651 = vmatpush2.msra.mxu0 0.0
        %652 = vmatprep.subr.mxu0 0.0
        %653 = vmatpush2.msra.mxu0 0.0
        %654 = vmatprep.subr.mxu0 0.0
        %655 = vmatpush2.msra.mxu0 0.0
        %656 = vmatprep.subr.mxu0 0.0
        %657 = vmatpush2.msra.mxu0 0.0
        %658 = vmatprep.subr.mxu0 0.0
        %659 = vmatpush2.msra.mxu0 0.0
        %660 = vmatprep.subr.mxu0 0.0
        %661 = vmatpush2.msra.mxu0 0.0
        %662 = vmatprep.subr.mxu0 0.0
        %663 = vmatpush2.msra.mxu0 0.0
        %664 = vmatprep.subr.mxu0 0.0
        %665 = vmatpush2.msra.mxu0 0.0
        %666 = vmatprep.subr.mxu0 0.0
        %667 = vmatpush2.msra.mxu0 0.0
        %668 = vmatprep.subr.mxu0 0.0
        %669 = vmatpush2.msra.mxu0 0.0
        %670 = vmatprep.subr.mxu0 0.0
        %671 = vmatpush2.msra.mxu0 0.0
        %672 = vmatprep.mubr.f32.mxu0 0.0
        %673 = vmatmul.mubr.f32.gmra.mxu0 %v569
        %v674 = vpop.f32.mrf.mxu0
        %v675 = vadd.f32 %v606, %v674
        %v676 = vpop.f32.mrf.mxu0
        %677 = vmatprep.mubr.f32.mxu0 0.0
        %678 = vmatmul.mubr.f32.gmra.mxu0 %v570
        %v679 = vpop.f32.mrf.mxu0
        %v680 = vadd.f32 %v606, %v679
        %v681 = vpop.f32.mrf.mxu0
        %682 = vmatprep.mubr.f32.mxu0 0.0
        %683 = vmatmul.mubr.f32.gmra.mxu0 %v571
        %v684 = vpop.f32.mrf.mxu0
        %v685 = vadd.f32 %v606, %v684
        %v686 = vpop.f32.mrf.mxu0
        %687 = vmatprep.mubr.f32.mxu0 0.0
        %688 = vmatmul.mubr.f32.gmra.mxu0 %v572
        %v689 = vpop.f32.mrf.mxu0
        %v690 = vadd.f32 %v606, %v689
        %v691 = vpop.f32.mrf.mxu0
        %692 = vmatprep.mubr.f32.mxu0 0.0
        %693 = vmatmul.mubr.f32.gmra.mxu0 %v573
        %v694 = vpop.f32.mrf.mxu0
        %v695 = vadd.f32 %v606, %v694
        %v696 = vpop.f32.mrf.mxu0
        %697 = vmatprep.mubr.f32.mxu0 0.0
        %698 = vmatmul.mubr.f32.gmra.mxu0 %v574
        %v699 = vpop.f32.mrf.mxu0
        %v700 = vadd.f32 %v606, %v699
        %v701 = vpop.f32.mrf.mxu0
        %702 = vmatprep.mubr.f32.mxu0 0.0
        %703 = vmatmul.mubr.f32.gmra.mxu0 %v575
        %v704 = vpop.f32.mrf.mxu0
        %v705 = vadd.f32 %v606, %v704
        %v706 = vpop.f32.mrf.mxu0
        %707 = vmatprep.mubr.f32.mxu0 0.0
        %708 = vmatmul.mubr.f32.gmra.mxu0 %v576
        %v709 = vpop.f32.mrf.mxu0
        %v710 = vadd.f32 %v606, %v709
        %v711 = vpop.f32.mrf.mxu0
        %712 = vmatprep.mubr.f32.mxu0 0.0
        %713 = vmatmul.mubr.f32.gmra.mxu0 %v577
        %v714 = vpop.f32.mrf.mxu0
        %v715 = vadd.f32 %v606, %v714
        %v716 = vpop.f32.mrf.mxu0
        %717 = vmatprep.mubr.f32.mxu0 0.0
        %718 = vmatmul.mubr.f32.gmra.mxu0 %v578
        %v719 = vpop.f32.mrf.mxu0
        %v720 = vadd.f32 %v606, %v719
        %v721 = vpop.f32.mrf.mxu0
        %722 = vmatprep.mubr.f32.mxu0 0.0
        %723 = vmatmul.mubr.f32.gmra.mxu0 %v579
        %v724 = vpop.f32.mrf.mxu0
        %v725 = vadd.f32 %v606, %v724
        %v726 = vpop.f32.mrf.mxu0
        %727 = vmatprep.mubr.f32.mxu0 0.0
        %728 = vmatmul.mubr.f32.gmra.mxu0 %v580
        %v729 = vpop.f32.mrf.mxu0
        %v730 = vadd.f32 %v606, %v729
        %v731 = vpop.f32.mrf.mxu0
        %732 = vmatprep.mubr.f32.mxu0 0.0
        %733 = vmatmul.mubr.f32.gmra.mxu0 %v581
        %v734 = vpop.f32.mrf.mxu0
        %v735 = vadd.f32 %v606, %v734
        %v736 = vpop.f32.mrf.mxu0
        %737 = vmatprep.mubr.f32.mxu0 0.0
        %738 = vmatmul.mubr.f32.gmra.mxu0 %v582
        %v739 = vpop.f32.mrf.mxu0
        %v740 = vadd.f32 %v606, %v739
        %v741 = vpop.f32.mrf.mxu0
        %742 = vmatprep.mubr.f32.mxu0 0.0
        %743 = vmatmul.mubr.f32.gmra.mxu0 %v583
        %v744 = vpop.f32.mrf.mxu0
        %v745 = vadd.f32 %v606, %v744
        %v746 = vpop.f32.mrf.mxu0
        %747 = vmatprep.mubr.f32.mxu0 0.0
        %748 = vmatmul.mubr.f32.gmra.mxu0 %v584
        %v749 = vpop.f32.mrf.mxu0
        %v750 = vadd.f32 %v606, %v749
        %v751 = vpop.f32.mrf.mxu0
        %752 = vdwg.mxu0
        %v753 = vadd.f32 %v675, %v427
        %v754 = vadd.f32 %v680, %v432
        %v755 = vadd.f32 %v685, %v437
        %v756 = vadd.f32 %v690, %v442
        %v757 = vadd.f32 %v695, %v447
        %v758 = vadd.f32 %v700, %v452
        %v759 = vadd.f32 %v705, %v457
        %v760 = vadd.f32 %v710, %v462
        %v761 = vadd.f32 %v715, %v467
        %v762 = vadd.f32 %v720, %v472
        %v763 = vadd.f32 %v725, %v477
        %v764 = vadd.f32 %v730, %v482
        %v765 = vadd.f32 %v735, %v487
        %v766 = vadd.f32 %v740, %v492
        %v767 = vadd.f32 %v745, %v497
        %v768 = vadd.f32 %v750, %v502
        %769 = vadd.xlane.f32.xlu0 %v753
        %v770 = vpop.xlane.xlu0 %769
        %771 = vadd.xlane.f32.xlu0 %v754
        %v772 = vpop.xlane.xlu0 %771
        %773 = vadd.xlane.f32.xlu0 %v755
        %v774 = vpop.xlane.xlu0 %773
        %775 = vadd.xlane.f32.xlu0 %v756
        %v776 = vpop.xlane.xlu0 %775
        %777 = vadd.xlane.f32.xlu0 %v757
        %v778 = vpop.xlane.xlu0 %777
        %779 = vadd.xlane.f32.xlu0 %v758
        %v780 = vpop.xlane.xlu0 %779
        %781 = vadd.xlane.f32.xlu0 %v759
        %v782 = vpop.xlane.xlu0 %781
        %783 = vadd.xlane.f32.xlu0 %v760
        %v784 = vpop.xlane.xlu0 %783
        %785 = vadd.xlane.f32.xlu0 %v761
        %v786 = vpop.xlane.xlu0 %785
        %787 = vadd.xlane.f32.xlu0 %v762
        %v788 = vpop.xlane.xlu0 %787
        %789 = vadd.xlane.f32.xlu0 %v763
        %v790 = vpop.xlane.xlu0 %789
        %791 = vadd.xlane.f32.xlu0 %v764
        %v792 = vpop.xlane.xlu0 %791
        %793 = vadd.xlane.f32.xlu0 %v765
        %v794 = vpop.xlane.xlu0 %793
        %795 = vadd.xlane.f32.xlu0 %v766
        %v796 = vpop.xlane.xlu0 %795
        %797 = vadd.xlane.f32.xlu0 %v767
        %v798 = vpop.xlane.xlu0 %797
        %799 = vadd.xlane.f32.xlu0 %v768
        %v800 = vpop.xlane.xlu0 %799
        %v801 = vrcp.pop 128.0
        %v802 = vmul.f32 %v770, %v801
        %v803 = vmul.f32 %v772, %v801
        %v804 = vmul.f32 %v774, %v801
        %v805 = vmul.f32 %v776, %v801
        %v806 = vmul.f32 %v778, %v801
        %v807 = vmul.f32 %v780, %v801
        %v808 = vmul.f32 %v782, %v801
        %v809 = vmul.f32 %v784, %v801
        %v810 = vmul.f32 %v786, %v801
        %v811 = vmul.f32 %v788, %v801
        %v812 = vmul.f32 %v790, %v801
        %v813 = vmul.f32 %v792, %v801
        %v814 = vmul.f32 %v794, %v801
        %v815 = vmul.f32 %v796, %v801
        %v816 = vmul.f32 %v798, %v801
        %v817 = vmul.f32 %v800, %v801
        %v818 = vsub.f32 %v753, %v802
        %v819 = vsub.f32 %v754, %v803
        %v820 = vsub.f32 %v755, %v804
        %v821 = vsub.f32 %v756, %v805
        %v822 = vsub.f32 %v757, %v806
        %v823 = vsub.f32 %v758, %v807
        %v824 = vsub.f32 %v759, %v808
        %v825 = vsub.f32 %v760, %v809
        %v826 = vsub.f32 %v761, %v810
        %v827 = vsub.f32 %v762, %v811
        %v828 = vsub.f32 %v763, %v812
        %v829 = vsub.f32 %v764, %v813
        %v830 = vsub.f32 %v765, %v814
        %v831 = vsub.f32 %v766, %v815
        %v832 = vsub.f32 %v767, %v816
        %v833 = vsub.f32 %v768, %v817
        %v834 = vmul.f32 %v818, %v818
        %v835 = vmul.f32 %v819, %v819
        %v836 = vmul.f32 %v820, %v820
        %v837 = vmul.f32 %v821, %v821
        %v838 = vmul.f32 %v822, %v822
        %v839 = vmul.f32 %v823, %v823
        %v840 = vmul.f32 %v824, %v824
        %v841 = vmul.f32 %v825, %v825
        %v842 = vmul.f32 %v826, %v826
        %v843 = vmul.f32 %v827, %v827
        %v844 = vmul.f32 %v828, %v828
        %v845 = vmul.f32 %v829, %v829
        %v846 = vmul.f32 %v830, %v830
        %v847 = vmul.f32 %v831, %v831
        %v848 = vmul.f32 %v832, %v832
        %v849 = vmul.f32 %v833, %v833
        %850 = vadd.xlane.f32.xlu0 %v834
        %v851 = vpop.xlane.xlu0 %850
        %852 = vadd.xlane.f32.xlu0 %v835
        %v853 = vpop.xlane.xlu0 %852
        %854 = vadd.xlane.f32.xlu0 %v836
        %v855 = vpop.xlane.xlu0 %854
        %856 = vadd.xlane.f32.xlu0 %v837
        %v857 = vpop.xlane.xlu0 %856
        %858 = vadd.xlane.f32.xlu0 %v838
        %v859 = vpop.xlane.xlu0 %858
        %860 = vadd.xlane.f32.xlu0 %v839
        %v861 = vpop.xlane.xlu0 %860
        %862 = vadd.xlane.f32.xlu0 %v840
        %v863 = vpop.xlane.xlu0 %862
        %864 = vadd.xlane.f32.xlu0 %v841
        %v865 = vpop.xlane.xlu0 %864
        %866 = vadd.xlane.f32.xlu0 %v842
        %v867 = vpop.xlane.xlu0 %866
        %868 = vadd.xlane.f32.xlu0 %v843
        %v869 = vpop.xlane.xlu0 %868
        %870 = vadd.xlane.f32.xlu0 %v844
        %v871 = vpop.xlane.xlu0 %870
        %872 = vadd.xlane.f32.xlu0 %v845
        %v873 = vpop.xlane.xlu0 %872
        %874 = vadd.xlane.f32.xlu0 %v846
        %v875 = vpop.xlane.xlu0 %874
        %876 = vadd.xlane.f32.xlu0 %v847
        %v877 = vpop.xlane.xlu0 %876
        %878 = vadd.xlane.f32.xlu0 %v848
        %v879 = vpop.xlane.xlu0 %878
        %880 = vadd.xlane.f32.xlu0 %v849
        %v881 = vpop.xlane.xlu0 %880
        %v882 = vmul.f32 %v851, %v801
        %v883 = vmul.f32 %v853, %v801
        %v884 = vmul.f32 %v855, %v801
        %v885 = vmul.f32 %v857, %v801
        %v886 = vmul.f32 %v859, %v801
        %v887 = vmul.f32 %v861, %v801
        %v888 = vmul.f32 %v863, %v801
        %v889 = vmul.f32 %v865, %v801
        %v890 = vmul.f32 %v867, %v801
        %v891 = vmul.f32 %v869, %v801
        %v892 = vmul.f32 %v871, %v801
        %v893 = vmul.f32 %v873, %v801
        %v894 = vmul.f32 %v875, %v801
        %v895 = vmul.f32 %v877, %v801
        %v896 = vmul.f32 %v879, %v801
        %v897 = vmul.f32 %v881, %v801
        %v898 = vadd.f32 %v882, 1e-05
        %v899 = vadd.f32 %v883, 1e-05
        %v900 = vadd.f32 %v884, 1e-05
        %v901 = vadd.f32 %v885, 1e-05
        %v902 = vadd.f32 %v886, 1e-05
        %v903 = vadd.f32 %v887, 1e-05
        %v904 = vadd.f32 %v888, 1e-05
        %v905 = vadd.f32 %v889, 1e-05
        %v906 = vadd.f32 %v890, 1e-05
        %v907 = vadd.f32 %v891, 1e-05
        %v908 = vadd.f32 %v892, 1e-05
        %v909 = vadd.f32 %v893, 1e-05
        %v910 = vadd.f32 %v894, 1e-05
        %v911 = vadd.f32 %v895, 1e-05
        %v912 = vadd.f32 %v896, 1e-05
        %v913 = vadd.f32 %v897, 1e-05
        %v914 = vrsqrt.pop %v898
        %v915 = vrsqrt.pop %v899
        %v916 = vrsqrt.pop %v900
        %v917 = vrsqrt.pop %v901
        %v918 = vrsqrt.pop %v902
        %v919 = vrsqrt.pop %v903
        %v920 = vrsqrt.pop %v904
        %v921 = vrsqrt.pop %v905
        %v922 = vrsqrt.pop %v906
        %v923 = vrsqrt.pop %v907
        %v924 = vrsqrt.pop %v908
        %v925 = vrsqrt.pop %v909
        %v926 = vrsqrt.pop %v910
        %v927 = vrsqrt.pop %v911
        %v928 = vrsqrt.pop %v912
        %v929 = vrsqrt.pop %v913
        %v930 = vmul.f32 %v818, %v914
        %v931 = vmul.f32 %v819, %v915
        %v932 = vmul.f32 %v820, %v916
        %v933 = vmul.f32 %v821, %v917
        %v934 = vmul.f32 %v822, %v918
        %v935 = vmul.f32 %v823, %v919
        %v936 = vmul.f32 %v824, %v920
        %v937 = vmul.f32 %v825, %v921
        %v938 = vmul.f32 %v826, %v922
        %v939 = vmul.f32 %v827, %v923
        %v940 = vmul.f32 %v828, %v924
        %v941 = vmul.f32 %v829, %v925
        %v942 = vmul.f32 %v830, %v926
        %v943 = vmul.f32 %v831, %v927
        %v944 = vmul.f32 %v832, %v928
        %v945 = vmul.f32 %v833, %v929
        %v946 = vld [vmem:[%s5] sm:$0x1]
        %v948 = vlaneseq
        %v949 = vshrl.u32 %v948, 7
        %v950 = vsub.s32 0, %v949
        %v951 = vrot.slane %v946, %v950
        %v953 = vmul.f32 %v930, %v951
        %v954 = vmul.f32 %v931, %v951
        %v955 = vmul.f32 %v932, %v951
        %v956 = vmul.f32 %v933, %v951
        %v957 = vmul.f32 %v934, %v951
        %v958 = vmul.f32 %v935, %v951
        %v959 = vmul.f32 %v936, %v951
        %v960 = vmul.f32 %v937, %v951
        %v961 = vmul.f32 %v938, %v951
        %v962 = vmul.f32 %v939, %v951
        %v963 = vmul.f32 %v940, %v951
        %v964 = vmul.f32 %v941, %v951
        %v965 = vmul.f32 %v942, %v951
        %v966 = vmul.f32 %v943, %v951
        %v967 = vmul.f32 %v944, %v951
        %v968 = vmul.f32 %v945, %v951
        %v969 = vld [vmem:[%s6] sm:$0x1]
        %v971 = vlaneseq
        %v972 = vshrl.u32 %v971, 7
        %v973 = vsub.s32 0, %v972
        %v974 = vrot.slane %v969, %v973
        %v976 = vadd.f32 %v953, %v974
        %v977 = vadd.f32 %v954, %v974
        %v978 = vadd.f32 %v955, %v974
        %v979 = vadd.f32 %v956, %v974
        %v980 = vadd.f32 %v957, %v974
        %v981 = vadd.f32 %v958, %v974
        %v982 = vadd.f32 %v959, %v974
        %v983 = vadd.f32 %v960, %v974
        %v984 = vadd.f32 %v961, %v974
        %v985 = vadd.f32 %v962, %v974
        %v986 = vadd.f32 %v963, %v974
        %v987 = vadd.f32 %v964, %v974
        %v988 = vadd.f32 %v965, %v974
        %v989 = vadd.f32 %v966, %v974
        %v990 = vadd.f32 %v967, %v974
        %v991 = vadd.f32 %v968, %v974
        %992 = vst [vmem:[%s272] sm:$0xff] %v976
        %993 = vst [vmem:[%s272 + $0x8] sm:$0xff] %v977
        %994 = vst [vmem:[%s272 + $0x10] sm:$0xff] %v978
        %995 = vst [vmem:[%s272 + $0x18] sm:$0xff] %v979
        %996 = vst [vmem:[%s272 + $0x20] sm:$0xff] %v980
        %997 = vst [vmem:[%s272 + $0x28] sm:$0xff] %v981
        %998 = vst [vmem:[%s272 + $0x30] sm:$0xff] %v982
        %999 = vst [vmem:[%s272 + $0x38] sm:$0xff] %v983
        %1000 = vst [vmem:[%s272 + $0x40] sm:$0xff] %v984
        %1001 = vst [vmem:[%s272 + $0x48] sm:$0xff] %v985
        %1002 = vst [vmem:[%s272 + $0x50] sm:$0xff] %v986
        %1003 = vst [vmem:[%s272 + $0x58] sm:$0xff] %v987
        %1004 = vst [vmem:[%s272 + $0x60] sm:$0xff] %v988
        %1005 = vst [vmem:[%s272 + $0x68] sm:$0xff] %v989
        %1006 = vst [vmem:[%s272 + $0x70] sm:$0xff] %v990
        %1007 = vst [vmem:[%s272 + $0x78] sm:$0xff] %v991
        %s1008 = sand.u32 %s181, 1
        %s1009 = scalar_lea.sflag [#allocation3], %s1008
        %s1010 = sand.u32 %s181, 1
        %s1011 = smul.addr %s1010, 128
        %s1012 = scalar_lea.vmem [#allocation2], %s1011
        // Predicated region
        $region49: #{projection_head.1} parent=47 // pred_check
          %p1013 = pneg %p191
        $region50: #{projection_head.1} parent=47 // pred_check_branch
          %1015 = sbr.rel (%p1013) target = $region52
        $region51: #{projection_head.1} parent=47 // pred_region
          %s1016 = smul.u32 16, %s21
          %s1018 = ssub.s32 2048, 2048
          %1019 = vsyncadd %s1009, %s1018
          %s1020 = smul.addr %s1016, 128
          %s1021 = scalar_lea.hbm %s7, %s1020
          %s1022 = sshll.u32 %s1012, 4
          %s1023 = int_to_ptr.vmem [resolvable:$true] %s1022
          %1028 = dma.vmem_to_hbm [thread:$0]  %s1023, 2048, %s1021, %s1009, 128, 128, 8
        $region52: #{projection_head.1} parent=47 // pred_fallthru
          _
      $region48: #{projection_head.1} parent=5 // pred_fallthru
        _
      %p1029 = scmp.le.s32.totalorder 2, %s16
      // Predicated region
      $region53: #{projection_head.1} parent=5 // pred_check
        %p1030 = pneg %p1029
      $region54: #{projection_head.1} parent=5 // pred_check_branch
        %1032 = sbr.rel (%p1030) target = $region56
      $region55: #{projection_head.1} parent=5 // pred_region
        %s1033 = ssub.s32 %s16, 2
        // Predicated region
        $region57: #{projection_head.1} parent=55 // pred_check
          %p1034 = pneg %p197
        $region58: #{projection_head.1} parent=55 // pred_check_branch
          %1036 = sbr.rel (%p1034) target = $region60
        $region59: #{projection_head.1} parent=55 // pred_region
          %s1037 = sand.u32 %s182, 1
          %s1038 = scalar_lea.sflag [#allocation3], %s1037
          %s1039 = sand.u32 %s182, 1
          %s1040 = smul.addr %s1039, 128
          %s1041 = scalar_lea.vmem [#allocation2], %s1040
          %1042 = dma.done %s1038, 2048
        $region60: #{projection_head.1} parent=55 // pred_fallthru
          _
      $region56: #{projection_head.1} parent=5 // pred_fallthru
        _
    $region6: #{projection_head.1} parent=1 // loop_footer
      %s20 = sadd.s32 1, %s16
    $region7: #{projection_head.1} parent=1 // loop_footer_branch
      %15 = sbr.rel target = $region3
    $region8: #{projection_head.1} parent=1 // loop_exit
      _
    %1043 = vsyncpa [#allocation3], 1
    %s1044 = scalar_lea.sflag [#allocation3], 1
    %1045 = vsyncpa %s1044, 1

</llo_original>
